<compile_context>
chip_gen: v5e
topology: v5e:2x2
jax: 0.10.0
libtpu: 0.0.40
codegen_flags: <defaults>
</compile_context>

<pallas_src>
import functools

import jax
import jax.numpy as jnp
from jax.experimental import pallas as pl
from jax.experimental.pallas import tpu as pltpu

HIDDEN = 128          # LSTM hidden size
OUT_DIM = 4           # fc output features
OUT_PAD = 128         # lane-dense padded output width
TB_MAX = 2048         # max batch tile (per-tile VMEM ~3 MiB, safe on every gen)
MIN_TILES = 2         # keep >= 2 grid programs for v7x's two TensorCores


def _pick_elem_dtype():
    """bf16 elementwise math on chips with bf16 VPU/EUP (v6e/v7x); f32 otherwise."""
    try:
        kind = jax.devices()[0].device_kind.lower()
    except Exception:
        return jnp.float32
    if any(tag in kind for tag in ("v2", "v3", "v4", "v5")):
        return jnp.float32
    return jnp.bfloat16


_ELEM_DTYPE = _pick_elem_dtype()


def _generator_kernel(x_ref, w1_ref, b1_ref, w2_ref, b2_ref, wfc_ref, bfc_ref,
                      out_ref, *, elem_dtype):
    """One batch tile: 2 single-step LSTM cells (zero init state) + padded fc."""
    H = HIDDEN
    x = x_ref[...]                                               # (TB, K_PAD) bf16

    # ---- LSTM layer 1 (gates pruned+reordered to [i, g, o], biases folded, f32 add)
    g1 = (jnp.dot(x, w1_ref[...], preferred_element_type=jnp.float32)
          + b1_ref[...]).astype(elem_dtype)
    i1 = jax.nn.sigmoid(g1[:, 0 * H:1 * H])
    gg1 = jnp.tanh(g1[:, 1 * H:2 * H])
    o1 = jax.nn.sigmoid(g1[:, 2 * H:3 * H])
    h1 = o1 * jnp.tanh(i1 * gg1)                                 # (TB, H) elem_dtype

    # ---- LSTM layer 2
    g2 = (jnp.dot(h1.astype(jnp.bfloat16), w2_ref[...],
                  preferred_element_type=jnp.float32) + b2_ref[...]).astype(elem_dtype)
    i2 = jax.nn.sigmoid(g2[:, 0 * H:1 * H])
    gg2 = jnp.tanh(g2[:, 1 * H:2 * H])
    o2 = jax.nn.sigmoid(g2[:, 2 * H:3 * H])
    h2 = o2 * jnp.tanh(i2 * gg2)                                 # (TB, H) elem_dtype

    # ---- fc into a lane-dense (TB, 128) bf16 slab (cols 4..127 have zero weights)
    out_ref[...] = (jnp.dot(h2.astype(jnp.bfloat16), wfc_ref[...],
                            preferred_element_type=jnp.float32)
                    + bfc_ref[...]).astype(out_ref.dtype)


def init_generator_params(key, latent_dim, expression_dim,
                          hidden=HIDDEN, out_dim=OUT_DIM):
    """Deterministic parameter init matching PyTorch LSTM/Linear shapes."""
    in_dim = latent_dim + expression_dim
    bound = 1.0 / jnp.sqrt(jnp.float32(hidden))
    ks = jax.random.split(key, 12)

    def u(k, shape):
        return jax.random.uniform(k, shape, jnp.float32, -bound, bound)

    return {
        # layer 1 (gate order [i, f, g, o], PyTorch convention)
        "w_ih1": u(ks[0], (4 * hidden, in_dim)),
        "w_hh1": u(ks[1], (4 * hidden, hidden)),   # unused at t=0 (h0=0)
        "b_ih1": u(ks[2], (4 * hidden,)),
        "b_hh1": u(ks[3], (4 * hidden,)),
        # layer 2
        "w_ih2": u(ks[4], (4 * hidden, hidden)),
        "w_hh2": u(ks[5], (4 * hidden, hidden)),   # unused at t=0 (h0=0)
        "b_ih2": u(ks[6], (4 * hidden,)),
        "b_hh2": u(ks[7], (4 * hidden,)),
        # fc
        "w_fc": u(ks[8], (out_dim, hidden)),
        "b_fc": u(ks[9], (out_dim,)),
    }


def _round_up(n, m):
    return ((n + m - 1) // m) * m


def prepare_params(params):
    """One-time weight prep: prune f-gate, fold biases, transpose, bf16, pad K & fc."""
    H = HIDDEN
    in_dim = params["w_ih1"].shape[1]
    k_pad = _round_up(in_dim, 128)                   # lane-dense input width

    def prune_igo_rows(w):                           # (4H, K) -> (3H, K), keep [i, g, o]
        return jnp.concatenate([w[0:H], w[2 * H:3 * H], w[3 * H:4 * H]], axis=0)

    def prune_igo_vec(b):                            # (4H,) -> (3H,)
        return jnp.concatenate([b[0:H], b[2 * H:3 * H], b[3 * H:4 * H]], axis=0)

    w1 = prune_igo_rows(params["w_ih1"]).T           # (in_dim, 3H) f32
    w1p = (jnp.zeros((k_pad, 3 * H), jnp.float32)
           .at[:in_dim].set(w1).astype(jnp.bfloat16))                    # (k_pad, 3H)
    b1 = prune_igo_vec(params["b_ih1"] + params["b_hh1"])[None, :]       # (1, 3H) f32
    w2 = prune_igo_rows(params["w_ih2"]).T.astype(jnp.bfloat16)          # (H, 3H)
    b2 = prune_igo_vec(params["b_ih2"] + params["b_hh2"])[None, :]       # (1, 3H) f32

    wfc = jnp.zeros((H, OUT_PAD), jnp.float32)
    wfc = wfc.at[:, :OUT_DIM].set(params["w_fc"].T).astype(jnp.bfloat16)  # (H, 128)
    bfc = jnp.zeros((1, OUT_PAD), jnp.float32)
    bfc = bfc.at[0, :OUT_DIM].set(params["b_fc"])                         # (1, 128) f32

    return {"w1": w1p, "b1": b1, "w2": w2, "b2": b2, "wfc": wfc, "bfc": bfc}


def _choose_tb(batch):
    """Batch tile: multiple of 16, grows with B, capped at TB_MAX, >=2 tiles when big."""
    b16 = _round_up(max(batch, 1), 16)
    if b16 <= 32:                       # tiny batch: one tile, don't bother splitting
        return b16
    tb = _round_up((b16 + MIN_TILES - 1) // MIN_TILES, 16)
    return min(tb, TB_MAX)


@functools.partial(jax.jit, static_argnames=("output_length",))
def generator_forward(prepared, noise, expression, output_length):
    """Equivalent of Generator.forward(noise, expression, output_length)."""
    B = noise.shape[0]
    x = jnp.concatenate([noise, expression], axis=-1).astype(jnp.bfloat16)  # (B, in_dim)
    in_dim = x.shape[1]
    k_pad = prepared["w1"].shape[0]

    tb = _choose_tb(B)
    padded_b = _round_up(B, tb)
    x = jnp.pad(x, ((0, padded_b - B), (0, k_pad - in_dim)))     # lane-dense input
    grid = (padded_b // tb,)

    resident = lambda shape: pl.BlockSpec(shape, lambda i: (0, 0))

    out_padded = pl.pallas_call(
        functools.partial(_generator_kernel, elem_dtype=_ELEM_DTYPE),
        out_shape=jax.ShapeDtypeStruct((padded_b, OUT_PAD), jnp.bfloat16),
        grid=grid,
        in_specs=[
            pl.BlockSpec((tb, k_pad), lambda i: (i, 0)),         # x, tiled over batch
            resident(prepared["w1"].shape),                      # weights stay VMEM-resident
            resident(prepared["b1"].shape),
            resident(prepared["w2"].shape),
            resident(prepared["b2"].shape),
            resident(prepared["wfc"].shape),
            resident(prepared["bfc"].shape),
        ],
        out_specs=pl.BlockSpec((tb, OUT_PAD), lambda i: (i, 0)),  # lane-dense bf16 slab
        compiler_params=pltpu.CompilerParams(
            dimension_semantics=("parallel",)),                   # shard batch over TCs
    )(x, prepared["w1"], prepared["b1"], prepared["w2"], prepared["b2"],
      prepared["wfc"], prepared["bfc"])

    out = out_padded[:B, :OUT_DIM].astype(jnp.float32)[:, None, :]   # (B, 1, 4)
    # out[:, -output_length:, :] on a length-1 sequence: identity for output_length >= 1
    # (output_length == 0 returns the full sequence — same quirk as PyTorch slicing).
    return out[:, -output_length:, :]


def _reference_forward(params, noise, expression, output_length):
    """Plain-JAX f32 reference (full LSTM cell math) for correctness checking."""
    H = HIDDEN
    x = jnp.concatenate([noise, expression], axis=-1).astype(jnp.float32)

    def cell(xin, w_ih, w_hh, b_ih, b_hh):
        h0 = jnp.zeros((xin.shape[0], H), jnp.float32)
        c0 = jnp.zeros((xin.shape[0], H), jnp.float32)
        g = xin @ w_ih.T + h0 @ w_hh.T + b_ih + b_hh
        i, f, gg, o = g[:, :H], g[:, H:2 * H], g[:, 2 * H:3 * H], g[:, 3 * H:]
        c = jax.nn.sigmoid(f) * c0 + jax.nn.sigmoid(i) * jnp.tanh(gg)
        return jax.nn.sigmoid(o) * jnp.tanh(c)

    h1 = cell(x, params["w_ih1"], params["w_hh1"], params["b_ih1"], params["b_hh1"])
    h2 = cell(h1, params["w_ih2"], params["w_hh2"], params["b_ih2"], params["b_hh2"])
    out = (h2 @ params["w_fc"].T + params["b_fc"])[:, None, :]
    return out[:, -output_length:, :]


if __name__ == "__main__":
    B, LATENT, EXPR = 2, 32, 16
    OUTPUT_LENGTH = 1

    key = jax.random.PRNGKey(0)
    kp, kn, ke, kn2, ke2 = jax.random.split(key, 5)
    params = init_generator_params(kp, LATENT, EXPR)
    prepared = prepare_params(params)           # one-time weight prep (hoisted out of forward)
    noise = jax.random.normal(kn, (B, LATENT), jnp.float32)
    expression = jax.random.normal(ke, (B, EXPR), jnp.float32)

    out = generator_forward(prepared, noise, expression, OUTPUT_LENGTH)
    out = jax.block_until_ready(out)

    ref = _reference_forward(params, noise, expression, OUTPUT_LENGTH)
    assert out.shape == (B, OUTPUT_LENGTH, OUT_DIM), out.shape
    # bf16 MXU operands + bf16 output slab (+ bf16 gates on v6e/v7x) vs f32 reference.
    assert jnp.allclose(out, ref, atol=4e-2, rtol=4e-2), (
        f"mismatch vs reference, max abs diff {jnp.max(jnp.abs(out - ref))}")

    # Second check exercising the multi-tile grid + batch-padding path (B=100 -> 2 tiles).
    B2 = 100
    noise2 = jax.random.normal(kn2, (B2, LATENT), jnp.float32)
    expression2 = jax.random.normal(ke2, (B2, EXPR), jnp.float32)
    out2 = jax.block_until_ready(generator_forward(prepared, noise2, expression2, OUTPUT_LENGTH))
    ref2 = _reference_forward(params, noise2, expression2, OUTPUT_LENGTH)
    assert out2.shape == (B2, OUTPUT_LENGTH, OUT_DIM), out2.shape
    assert jnp.allclose(out2, ref2, atol=4e-2, rtol=4e-2), (
        f"multi-tile mismatch vs reference, max abs diff {jnp.max(jnp.abs(out2 - ref2))}")

    print("KERNEL_OK")
</pallas_src>

<mosaic_0001>
module attributes {stable_mosaic.version = 11 : i64} {
  func.func @_generator_kernel(%arg0: i32, %arg1: memref<16x128xbf16, #tpu.memory_space<vmem>>, %arg2: memref<128x384xbf16, #tpu.memory_space<vmem>>, %arg3: memref<1x384xf32, #tpu.memory_space<vmem>>, %arg4: memref<128x384xbf16, #tpu.memory_space<vmem>>, %arg5: memref<1x384xf32, #tpu.memory_space<vmem>>, %arg6: memref<128x128xbf16, #tpu.memory_space<vmem>>, %arg7: memref<1x128xf32, #tpu.memory_space<vmem>>, %arg8: memref<16x128xbf16, #tpu.memory_space<vmem>>) attributes {dimension_semantics = [#tpu.dimension_semantics<parallel>], iteration_bounds = array<i64: 1>, scalar_prefetch = 0 : i64, scratch_operands = 0 : i64, tpu.core_type = #tpu.core_type<tc>, window_params = [{transform_indices = @transform_0, window_bounds = array<i64: 16, 128>}, {pipeline_mode = #tpu.pipeline_mode<synchronous>, transform_indices = @transform_1, window_bounds = array<i64: 128, 384>}, {pipeline_mode = #tpu.pipeline_mode<synchronous>, transform_indices = @transform_2, window_bounds = array<i64: 1, 384>}, {pipeline_mode = #tpu.pipeline_mode<synchronous>, transform_indices = @transform_3, window_bounds = array<i64: 128, 384>}, {pipeline_mode = #tpu.pipeline_mode<synchronous>, transform_indices = @transform_4, window_bounds = array<i64: 1, 384>}, {pipeline_mode = #tpu.pipeline_mode<synchronous>, transform_indices = @transform_5, window_bounds = array<i64: 128, 128>}, {pipeline_mode = #tpu.pipeline_mode<synchronous>, transform_indices = @transform_6, window_bounds = array<i64: 1, 128>}, {transform_indices = @transform_7, window_bounds = array<i64: 16, 128>}]} {
    %c0 = arith.constant 0 : index
    %c0_0 = arith.constant 0 : index
    %0 = vector.load %arg1[%c0, %c0_0] : memref<16x128xbf16, #tpu.memory_space<vmem>>, vector<16x128xbf16>
    %c0_1 = arith.constant 0 : index
    %c0_2 = arith.constant 0 : index
    %1 = vector.load %arg2[%c0_1, %c0_2] : memref<128x384xbf16, #tpu.memory_space<vmem>>, vector<128x384xbf16>
    %cst = arith.constant dense<0.000000e+00> : vector<16x384xf32>
    %2 = tpu.matmul %0, %1, %cst {dimension_numbers = #tpu.dot_dimension_numbers<[1], [0], [0], [1], [0, 0, 1, 1], [], []>} : vector<16x128xbf16>, vector<128x384xbf16>, vector<16x384xf32> -> vector<16x384xf32>
    %c0_3 = arith.constant 0 : index
    %c0_4 = arith.constant 0 : index
    %3 = vector.load %arg3[%c0_3, %c0_4] : memref<1x384xf32, #tpu.memory_space<vmem>>, vector<1x384xf32>
    %4 = vector.broadcast %3 : vector<1x384xf32> to vector<16x384xf32>
    %5 = arith.addf %2, %4 : vector<16x384xf32>
    %6 = arith.truncf %5 : vector<16x384xf32> to vector<16x384xbf16>
    %7 = vector.extract_strided_slice %6 {offsets = [0, 0], sizes = [16, 128], strides = [1, 1]} : vector<16x384xbf16> to vector<16x128xbf16>
    %8 = arith.negf %7 : vector<16x128xbf16>
    %9 = math.exp %8 : vector<16x128xbf16>
    %cst_5 = arith.constant 1.000000e+00 : bf16
    %10 = vector.broadcast %cst_5 : bf16 to vector<16x128xbf16>
    %11 = arith.addf %10, %9 : vector<16x128xbf16>
    %12 = arith.divf %10, %11 : vector<16x128xbf16>
    %13 = vector.extract_strided_slice %6 {offsets = [0, 128], sizes = [16, 128], strides = [1, 1]} : vector<16x384xbf16> to vector<16x128xbf16>
    %14 = math.tanh %13 : vector<16x128xbf16>
    %15 = vector.extract_strided_slice %6 {offsets = [0, 256], sizes = [16, 128], strides = [1, 1]} : vector<16x384xbf16> to vector<16x128xbf16>
    %16 = arith.negf %15 : vector<16x128xbf16>
    %17 = math.exp %16 : vector<16x128xbf16>
    %cst_6 = arith.constant 1.000000e+00 : bf16
    %18 = vector.broadcast %cst_6 : bf16 to vector<16x128xbf16>
    %19 = arith.addf %18, %17 : vector<16x128xbf16>
    %20 = arith.divf %18, %19 : vector<16x128xbf16>
    %21 = arith.mulf %12, %14 : vector<16x128xbf16>
    %22 = math.tanh %21 : vector<16x128xbf16>
    %23 = arith.mulf %20, %22 : vector<16x128xbf16>
    %c0_7 = arith.constant 0 : index
    %c0_8 = arith.constant 0 : index
    %24 = vector.load %arg4[%c0_7, %c0_8] : memref<128x384xbf16, #tpu.memory_space<vmem>>, vector<128x384xbf16>
    %cst_9 = arith.constant dense<0.000000e+00> : vector<16x384xf32>
    %25 = tpu.matmul %23, %24, %cst_9 {dimension_numbers = #tpu.dot_dimension_numbers<[1], [0], [0], [1], [0, 0, 1, 1], [], []>} : vector<16x128xbf16>, vector<128x384xbf16>, vector<16x384xf32> -> vector<16x384xf32>
    %c0_10 = arith.constant 0 : index
    %c0_11 = arith.constant 0 : index
    %26 = vector.load %arg5[%c0_10, %c0_11] : memref<1x384xf32, #tpu.memory_space<vmem>>, vector<1x384xf32>
    %27 = vector.broadcast %26 : vector<1x384xf32> to vector<16x384xf32>
    %28 = arith.addf %25, %27 : vector<16x384xf32>
    %29 = arith.truncf %28 : vector<16x384xf32> to vector<16x384xbf16>
    %30 = vector.extract_strided_slice %29 {offsets = [0, 0], sizes = [16, 128], strides = [1, 1]} : vector<16x384xbf16> to vector<16x128xbf16>
    %31 = arith.negf %30 : vector<16x128xbf16>
    %32 = math.exp %31 : vector<16x128xbf16>
    %cst_12 = arith.constant 1.000000e+00 : bf16
    %33 = vector.broadcast %cst_12 : bf16 to vector<16x128xbf16>
    %34 = arith.addf %33, %32 : vector<16x128xbf16>
    %35 = arith.divf %33, %34 : vector<16x128xbf16>
    %36 = vector.extract_strided_slice %29 {offsets = [0, 128], sizes = [16, 128], strides = [1, 1]} : vector<16x384xbf16> to vector<16x128xbf16>
    %37 = math.tanh %36 : vector<16x128xbf16>
    %38 = vector.extract_strided_slice %29 {offsets = [0, 256], sizes = [16, 128], strides = [1, 1]} : vector<16x384xbf16> to vector<16x128xbf16>
    %39 = arith.negf %38 : vector<16x128xbf16>
    %40 = math.exp %39 : vector<16x128xbf16>
    %cst_13 = arith.constant 1.000000e+00 : bf16
    %41 = vector.broadcast %cst_13 : bf16 to vector<16x128xbf16>
    %42 = arith.addf %41, %40 : vector<16x128xbf16>
    %43 = arith.divf %41, %42 : vector<16x128xbf16>
    %44 = arith.mulf %35, %37 : vector<16x128xbf16>
    %45 = math.tanh %44 : vector<16x128xbf16>
    %46 = arith.mulf %43, %45 : vector<16x128xbf16>
    %c0_14 = arith.constant 0 : index
    %c0_15 = arith.constant 0 : index
    %47 = vector.load %arg6[%c0_14, %c0_15] : memref<128x128xbf16, #tpu.memory_space<vmem>>, vector<128x128xbf16>
    %cst_16 = arith.constant dense<0.000000e+00> : vector<16x128xf32>
    %48 = tpu.matmul %46, %47, %cst_16 {dimension_numbers = #tpu.dot_dimension_numbers<[1], [0], [0], [1], [0, 0, 1, 1], [], []>} : vector<16x128xbf16>, vector<128x128xbf16>, vector<16x128xf32> -> vector<16x128xf32>
    %c0_17 = arith.constant 0 : index
    %c0_18 = arith.constant 0 : index
    %49 = vector.load %arg7[%c0_17, %c0_18] : memref<1x128xf32, #tpu.memory_space<vmem>>, vector<1x128xf32>
    %50 = vector.broadcast %49 : vector<1x128xf32> to vector<16x128xf32>
    %51 = arith.addf %48, %50 : vector<16x128xf32>
    %52 = arith.truncf %51 : vector<16x128xf32> to vector<16x128xbf16>
    %c0_19 = arith.constant 0 : index
    %c0_20 = arith.constant 0 : index
    %53 = vector.load %arg8[%c0_19, %c0_20] : memref<16x128xbf16, #tpu.memory_space<vmem>>, vector<16x128xbf16>
    tpu.vector_store %arg8[%c0_19, %c0_20], %52 {strides = array<i32>} : memref<16x128xbf16, #tpu.memory_space<vmem>>, vector<16x128xbf16>,
    return
  }
  func.func @transform_0(%arg0: i32) -> (i32, i32) {
    %c0_i32 = arith.constant 0 : i32
    %c0_i32_0 = arith.constant 0 : i32
    return %arg0, %c0_i32 : i32, i32
  }
  func.func @transform_1(%arg0: i32) -> (i32, i32) {
    %c0_i32 = arith.constant 0 : i32
    %c0_i32_0 = arith.constant 0 : i32
    %c0_i32_1 = arith.constant 0 : i32
    return %c0_i32, %c0_i32_0 : i32, i32
  }
  func.func @transform_2(%arg0: i32) -> (i32, i32) {
    %c0_i32 = arith.constant 0 : i32
    %c0_i32_0 = arith.constant 0 : i32
    %c0_i32_1 = arith.constant 0 : i32
    return %c0_i32, %c0_i32_0 : i32, i32
  }
  func.func @transform_3(%arg0: i32) -> (i32, i32) {
    %c0_i32 = arith.constant 0 : i32
    %c0_i32_0 = arith.constant 0 : i32
    %c0_i32_1 = arith.constant 0 : i32
    return %c0_i32, %c0_i32_0 : i32, i32
  }
  func.func @transform_4(%arg0: i32) -> (i32, i32) {
    %c0_i32 = arith.constant 0 : i32
    %c0_i32_0 = arith.constant 0 : i32
    %c0_i32_1 = arith.constant 0 : i32
    return %c0_i32, %c0_i32_0 : i32, i32
  }
  func.func @transform_5(%arg0: i32) -> (i32, i32) {
    %c0_i32 = arith.constant 0 : i32
    %c0_i32_0 = arith.constant 0 : i32
    %c0_i32_1 = arith.constant 0 : i32
    return %c0_i32, %c0_i32_0 : i32, i32
  }
  func.func @transform_6(%arg0: i32) -> (i32, i32) {
    %c0_i32 = arith.constant 0 : i32
    %c0_i32_0 = arith.constant 0 : i32
    %c0_i32_1 = arith.constant 0 : i32
    return %c0_i32, %c0_i32_0 : i32, i32
  }
  func.func @transform_7(%arg0: i32) -> (i32, i32) {
    %c0_i32 = arith.constant 0 : i32
    %c0_i32_0 = arith.constant 0 : i32
    return %arg0, %c0_i32 : i32, i32
  }
}

</mosaic_0001>

<llo_original>
// kernel: generator_forward.1
$region0: #{generator_forward.1}
  #allocation0 [shape = 'u32[]', space=smem, size = 0x4, offset = 0x4, fixed_abs, tag = 'smem constant byte address 0x4 - core index']
  #allocation1 [shape = 'u32[72,128]{1,0:T(1,128)}', space=vmem, size = 0x9000, scoped, tag = 'internal scratch']
  %s0 = inlined_call_operand.vmem [shape: bf16[16,128], index: 0, kind: input, shape index: {}]
  %s1 = inlined_call_operand.hbm [shape: bf16[128,384], index: 1, kind: input, shape index: {}]
  %s2 = inlined_call_operand.vmem [shape: f32[1,384], index: 2, kind: input, shape index: {}]
  %s3 = inlined_call_operand.hbm [shape: bf16[128,384], index: 3, kind: input, shape index: {}]
  %s4 = inlined_call_operand.vmem [shape: f32[1,384], index: 4, kind: input, shape index: {}]
  %s5 = inlined_call_operand.hbm [shape: bf16[128,128], index: 5, kind: input, shape index: {}]
  %s6 = inlined_call_operand.vmem [shape: f32[1,128], index: 6, kind: input, shape index: {}]
  %s7 = inlined_call_operand.vmem [shape: bf16[16,128], index: 7, kind: output, shape index: {}]
  %s8 = sld [smem:[#allocation0]]
  $region50: #{generator_forward.1} parent=0
    _
  %s10 = ssub.s32 1, %s8
  %s11 = scalar_select 0, %s10, %s8
  $region1: #{generator_forward.1} parent=0
    #allocation2 [shape = 'u8[98304]{0}', space=vmem, size = 0x18000, scoped, tag = 'input window, operand 1, single buffered']
    #allocation3 [shape = 's32[1]{0}', space=sflag, size = 0x4, scoped, tag = 'scoped memory for generator_forward.1']
    #allocation4 [shape = 'u8[98304]{0}', space=vmem, size = 0x18000, scoped, tag = 'input window, operand 3, single buffered']
    #allocation5 [shape = 's32[1]{0}', space=sflag, size = 0x4, scoped, tag = 'scoped memory for generator_forward.1']
    #allocation6 [shape = 'u8[32768]{0}', space=vmem, size = 0x8000, scoped, tag = 'input window, operand 5, single buffered']
    %12 = vsyncpa [#allocation3], 0
    %13 = vsyncpa [#allocation5], 0
    // Predicated region
    $region2: #{generator_forward.1} parent=1 // pred_check
      _
    $region3: #{generator_forward.1} parent=1 // pred_check_branch
      %15 = sbr.rel (0) target = $region5
    $region4: #{generator_forward.1} parent=1 // pred_region
      _
    $region5: #{generator_forward.1} parent=1 // pred_fallthru
      _
    // Predicated region
    $region6: #{generator_forward.1} parent=1 // pred_check
      _
    $region7: #{generator_forward.1} parent=1 // pred_check_branch
      %17 = sbr.rel (0) target = $region9
    $region8: #{generator_forward.1} parent=1 // pred_region
      %19 = vsyncadd [#allocation3], 0
      %s20 = sshll.u32 %s1, 4
      %s21 = int_to_ptr.hbm [resolvable:$true] %s20
      %s22 = sshll.u32 [#allocation2], 4
      %s23 = int_to_ptr.vmem [resolvable:$true] %s22
      %28 = dma.hbm_to_vmem [thread:$0]  %s21, 3072, %s23, [#allocation3], 192, 192, 12
    $region9: #{generator_forward.1} parent=1 // pred_fallthru
      _
    // Predicated region
    $region10: #{generator_forward.1} parent=1 // pred_check
      _
    $region11: #{generator_forward.1} parent=1 // pred_check_branch
      %30 = sbr.rel (0) target = $region13
    $region12: #{generator_forward.1} parent=1 // pred_region
      _
    $region13: #{generator_forward.1} parent=1 // pred_fallthru
      _
    // Predicated region
    $region14: #{generator_forward.1} parent=1 // pred_check
      _
    $region15: #{generator_forward.1} parent=1 // pred_check_branch
      %32 = sbr.rel (0) target = $region17
    $region16: #{generator_forward.1} parent=1 // pred_region
      %34 = vsyncadd [#allocation5], 0
      %s35 = sshll.u32 %s3, 4
      %s36 = int_to_ptr.hbm [resolvable:$true] %s35
      %s37 = sshll.u32 [#allocation4], 4
      %s38 = int_to_ptr.vmem [resolvable:$true] %s37
      %43 = dma.hbm_to_vmem [thread:$0]  %s36, 3072, %s38, [#allocation5], 192, 192, 12
    $region17: #{generator_forward.1} parent=1 // pred_fallthru
      _
    // Predicated region
    $region18: #{generator_forward.1} parent=1 // pred_check
      _
    $region19: #{generator_forward.1} parent=1 // pred_check_branch
      %45 = sbr.rel (0) target = $region21
    $region20: #{generator_forward.1} parent=1 // pred_region
      _
    $region21: #{generator_forward.1} parent=1 // pred_fallthru
      _
    // Predicated region
    $region22: #{generator_forward.1} parent=1 // pred_check
      _
    $region23: #{generator_forward.1} parent=1 // pred_check_branch
      %47 = sbr.rel (0) target = $region25
    $region24: #{generator_forward.1} parent=1 // pred_region
      %49 = vsyncadd [#allocation5], 0
      %s50 = sshll.u32 %s5, 4
      %s51 = int_to_ptr.hbm [resolvable:$true] %s50
      %s52 = sshll.u32 [#allocation6], 4
      %s53 = int_to_ptr.vmem [resolvable:$true] %s52
      %58 = dma.hbm_to_vmem [thread:$0]  %s51, 1024, %s53, [#allocation5], 64, 64, 4
    $region25: #{generator_forward.1} parent=1 // pred_fallthru
      _
    // Predicated region
    $region26: #{generator_forward.1} parent=1 // pred_check
      _
    $region27: #{generator_forward.1} parent=1 // pred_check_branch
      %60 = sbr.rel (0) target = $region29
    $region28: #{generator_forward.1} parent=1 // pred_region
      _
    $region29: #{generator_forward.1} parent=1 // pred_fallthru
      _
    // Predicated region
    $region30: #{generator_forward.1} parent=1 // pred_check
      _
    $region31: #{generator_forward.1} parent=1 // pred_check_branch
      %62 = sbr.rel (0) target = $region33
    $region32: #{generator_forward.1} parent=1 // pred_region
      %64 = dma.done [#allocation3], 3072
    $region33: #{generator_forward.1} parent=1 // pred_fallthru
      _
    // Predicated region
    $region34: #{generator_forward.1} parent=1 // pred_check
      _
    $region35: #{generator_forward.1} parent=1 // pred_check_branch
      %66 = sbr.rel (0) target = $region37
    $region36: #{generator_forward.1} parent=1 // pred_region
      %68 = dma.done [#allocation5], 3072
    $region37: #{generator_forward.1} parent=1 // pred_fallthru
      _
    // Predicated region
    $region38: #{generator_forward.1} parent=1 // pred_check
      _
    $region39: #{generator_forward.1} parent=1 // pred_check_branch
      %70 = sbr.rel (0) target = $region41
    $region40: #{generator_forward.1} parent=1 // pred_region
      %72 = dma.done [#allocation5], 1024
    $region41: #{generator_forward.1} parent=1 // pred_fallthru
      _
    %v74 = vld [vmem:[%s0] sm:$0xf]
    %v75 = vld [vmem:[%s0 + $0x4] sm:$0xf]
    %v76 = vld [vmem:[#allocation2] sm:$0xff]
    %v77 = vld [vmem:[#allocation2 + $0x8] sm:$0xf]
    %v78 = vld [vmem:[#allocation2 + $0xc] sm:$0xff]
    %v79 = vld [vmem:[#allocation2 + $0x14] sm:$0xf]
    %v80 = vld [vmem:[#allocation2 + $0x18] sm:$0xff]
    %v81 = vld [vmem:[#allocation2 + $0x20] sm:$0xf]
    %v82 = vld [vmem:[#allocation2 + $0x24] sm:$0xff]
    %v83 = vld [vmem:[#allocation2 + $0x2c] sm:$0xf]
    %v84 = vld [vmem:[#allocation2 + $0x30] sm:$0xff]
    %v85 = vld [vmem:[#allocation2 + $0x38] sm:$0xf]
    %v86 = vld [vmem:[#allocation2 + $0x3c] sm:$0xff]
    %v87 = vld [vmem:[#allocation2 + $0x44] sm:$0xf]
    %v88 = vld [vmem:[#allocation2 + $0x48] sm:$0xff]
    %v89 = vld [vmem:[#allocation2 + $0x50] sm:$0xf]
    %v90 = vld [vmem:[#allocation2 + $0x54] sm:$0xff]
    %v91 = vld [vmem:[#allocation2 + $0x5c] sm:$0xf]
    %v92 = vld [vmem:[#allocation2 + $0x60] sm:$0xff]
    %v93 = vld [vmem:[#allocation2 + $0x68] sm:$0xf]
    %v94 = vld [vmem:[#allocation2 + $0x6c] sm:$0xff]
    %v95 = vld [vmem:[#allocation2 + $0x74] sm:$0xf]
    %v96 = vld [vmem:[#allocation2 + $0x78] sm:$0xff]
    %v97 = vld [vmem:[#allocation2 + $0x80] sm:$0xf]
    %v98 = vld [vmem:[#allocation2 + $0x84] sm:$0xff]
    %v99 = vld [vmem:[#allocation2 + $0x8c] sm:$0xf]
    %v100 = vld [vmem:[#allocation2 + $0x90] sm:$0xff]
    %v101 = vld [vmem:[#allocation2 + $0x98] sm:$0xf]
    %v102 = vld [vmem:[#allocation2 + $0x9c] sm:$0xff]
    %v103 = vld [vmem:[#allocation2 + $0xa4] sm:$0xf]
    %v104 = vld [vmem:[#allocation2 + $0xa8] sm:$0xff]
    %v105 = vld [vmem:[#allocation2 + $0xb0] sm:$0xf]
    %v106 = vld [vmem:[#allocation2 + $0xb4] sm:$0xff]
    %v107 = vld [vmem:[#allocation2 + $0xbc] sm:$0xf]
    %v108 = vld [vmem:[%s2] sm:$0x7]
    %v110 = vperm.slane %v108, 0
    %v111 = vperm.slane %v108, 1
    %v112 = vperm.slane %v108, 2
    %v118 = vunpack.c.l.b16 %v74
    %v119 = vunpack.c.l.b16 %v75
    %v120 = vpack.c.b16 %v119, %v118
    %v154 = vunpack.c.l.b16 %v76
    %v155 = vunpack.c.h.b16 %v76
    %v156 = vunpack.c.l.b16 %v77
    %v157 = vunpack.c.l.b16 %v78
    %v158 = vunpack.c.h.b16 %v78
    %v159 = vunpack.c.l.b16 %v79
    %v160 = vunpack.c.l.b16 %v80
    %v161 = vunpack.c.h.b16 %v80
    %v162 = vunpack.c.l.b16 %v81
    %v163 = vunpack.c.l.b16 %v82
    %v164 = vunpack.c.h.b16 %v82
    %v165 = vunpack.c.l.b16 %v83
    %v166 = vunpack.c.l.b16 %v84
    %v167 = vunpack.c.h.b16 %v84
    %v168 = vunpack.c.l.b16 %v85
    %v169 = vunpack.c.l.b16 %v86
    %v170 = vunpack.c.h.b16 %v86
    %v171 = vunpack.c.l.b16 %v87
    %v172 = vunpack.c.l.b16 %v88
    %v173 = vunpack.c.h.b16 %v88
    %v174 = vunpack.c.l.b16 %v89
    %v175 = vunpack.c.l.b16 %v90
    %v176 = vunpack.c.h.b16 %v90
    %v177 = vunpack.c.l.b16 %v91
    %v178 = vunpack.c.l.b16 %v92
    %v179 = vunpack.c.h.b16 %v92
    %v180 = vunpack.c.l.b16 %v93
    %v181 = vunpack.c.l.b16 %v94
    %v182 = vunpack.c.h.b16 %v94
    %v183 = vunpack.c.l.b16 %v95
    %v184 = vunpack.c.l.b16 %v96
    %v185 = vunpack.c.h.b16 %v96
    %v186 = vunpack.c.l.b16 %v97
    %v187 = vunpack.c.l.b16 %v98
    %v188 = vunpack.c.h.b16 %v98
    %v189 = vunpack.c.l.b16 %v99
    %v190 = vunpack.c.l.b16 %v100
    %v191 = vunpack.c.h.b16 %v100
    %v192 = vunpack.c.l.b16 %v101
    %v193 = vunpack.c.l.b16 %v102
    %v194 = vunpack.c.h.b16 %v102
    %v195 = vunpack.c.l.b16 %v103
    %v196 = vunpack.c.l.b16 %v104
    %v197 = vunpack.c.h.b16 %v104
    %v198 = vunpack.c.l.b16 %v105
    %v199 = vunpack.c.l.b16 %v106
    %v200 = vunpack.c.h.b16 %v106
    %v201 = vunpack.c.l.b16 %v107
    %v202 = vpack.c.b16 %v157, %v154
    %v203 = vpack.c.b16 %v158, %v155
    %v204 = vpack.c.b16 %v159, %v156
    %v205 = vpack.c.b16 %v163, %v160
    %v206 = vpack.c.b16 %v164, %v161
    %v207 = vpack.c.b16 %v165, %v162
    %v208 = vpack.c.b16 %v169, %v166
    %v209 = vpack.c.b16 %v170, %v167
    %v210 = vpack.c.b16 %v171, %v168
    %v211 = vpack.c.b16 %v175, %v172
    %v212 = vpack.c.b16 %v176, %v173
    %v213 = vpack.c.b16 %v177, %v174
    %v214 = vpack.c.b16 %v181, %v178
    %v215 = vpack.c.b16 %v182, %v179
    %v216 = vpack.c.b16 %v183, %v180
    %v217 = vpack.c.b16 %v187, %v184
    %v218 = vpack.c.b16 %v188, %v185
    %v219 = vpack.c.b16 %v189, %v186
    %v220 = vpack.c.b16 %v193, %v190
    %v221 = vpack.c.b16 %v194, %v191
    %v222 = vpack.c.b16 %v195, %v192
    %v223 = vpack.c.b16 %v199, %v196
    %v224 = vpack.c.b16 %v200, %v197
    %v225 = vpack.c.b16 %v201, %v198
    %250 = vmatpush.bf16.msra.mxu0 %v223
    %251 = vmatpush.bf16.msra.mxu0 %v220
    %252 = vmatpush.bf16.msra.mxu0 %v217
    %253 = vmatpush.bf16.msra.mxu0 %v214
    %254 = vmatpush.bf16.msra.mxu0 %v211
    %255 = vmatpush.bf16.msra.mxu0 %v208
    %256 = vmatpush.bf16.msra.mxu0 %v205
    %257 = vmatpush.bf16.msra.mxu0 %v202
    %258 = vmatmul.bf16.gmra.mxu0 %v120
    %v259 = vpop.f32.mrf.mxu0
    %v260 = vadd.f32 %v110, %v259
    %v261 = vpop.f32.mrf.mxu0
    %v262 = vadd.f32 %v110, %v261
    %263 = vdwg.mxu0
    %264 = vmatpush.bf16.msra.mxu0 %v224
    %265 = vmatpush.bf16.msra.mxu0 %v221
    %266 = vmatpush.bf16.msra.mxu0 %v218
    %267 = vmatpush.bf16.msra.mxu0 %v215
    %268 = vmatpush.bf16.msra.mxu0 %v212
    %269 = vmatpush.bf16.msra.mxu0 %v209
    %270 = vmatpush.bf16.msra.mxu0 %v206
    %271 = vmatpush.bf16.msra.mxu0 %v203
    %272 = vmatmul.bf16.gmra.mxu0 %v120
    %v273 = vpop.f32.mrf.mxu0
    %v274 = vadd.f32 %v111, %v273
    %v275 = vpop.f32.mrf.mxu0
    %v276 = vadd.f32 %v111, %v275
    %277 = vdwg.mxu0
    %278 = vmatpush.bf16.msra.mxu0 %v225
    %279 = vmatpush.bf16.msra.mxu0 %v222
    %280 = vmatpush.bf16.msra.mxu0 %v219
    %281 = vmatpush.bf16.msra.mxu0 %v216
    %282 = vmatpush.bf16.msra.mxu0 %v213
    %283 = vmatpush.bf16.msra.mxu0 %v210
    %284 = vmatpush.bf16.msra.mxu0 %v207
    %285 = vmatpush.bf16.msra.mxu0 %v204
    %286 = vmatmul.bf16.gmra.mxu0 %v120
    %v287 = vpop.f32.mrf.mxu0
    %v288 = vadd.f32 %v112, %v287
    %v289 = vpop.f32.mrf.mxu0
    %v290 = vadd.f32 %v112, %v289
    %291 = vdwg.mxu0
    %v292 = vpack.c.bf16 %v274, %v260
    %v293 = vpack.c.bf16 %v288, %v288
    %v294 = vpack.c.bf16 %v276, %v262
    %v295 = vpack.c.bf16 %v290, %v290
    %v296 = vxor.u32 %v292, 2147516416
    %v297 = vxor.u32 %v294, 2147516416
    %v298 = vunpack.c.l.bf16 %v296
    %v299 = vunpack.c.l.bf16 %v297
    %v300 = vmul.f32 %v298, 1.442695
    %v301 = vpow.pop %v300
    %v302 = vmul.f32 %v299, 1.442695
    %v303 = vpow.pop %v302
    %v304 = vpack.c.bf16 %v301, %v301
    %v305 = vpack.c.bf16 %v303, %v303
    %v306 = vunpack.c.l.bf16 %v304
    %v307 = vunpack.c.l.bf16 %v305
    %v308 = vadd.f32 %v306, 1.0
    %v309 = vadd.f32 %v307, 1.0
    %v310 = vpack.c.bf16 %v308, %v308
    %v311 = vpack.c.bf16 %v309, %v309
    %v312 = vunpack.c.h.bf16 1065369472
    %v313 = vunpack.c.l.bf16 1065369472
    %v314 = vunpack.c.h.bf16 %v310
    %v315 = vunpack.c.l.bf16 %v310
    %v316 = vrcp.pop %v314
    %v317 = vmul.f32 %v312, %v316
    %v318 = vrcp.pop %v315
    %v319 = vmul.f32 %v313, %v318
    %v320 = vpack.c.bf16 %v317, %v319
    %v321 = vunpack.c.h.bf16 %v311
    %v322 = vunpack.c.l.bf16 %v311
    %v323 = vrcp.pop %v321
    %v324 = vmul.f32 %v312, %v323
    %v325 = vrcp.pop %v322
    %v326 = vmul.f32 %v313, %v325
    %v327 = vpack.c.bf16 %v324, %v326
    %v330 = vrot.slane %v292, 4
    %v331 = vrot.slane %v294, 4
    %v334 = vunpack.c.l.bf16 %v330
    %v335 = vunpack.c.l.bf16 %v331
    %v336 = vtanh.pop %v334
    %v337 = vtanh.pop %v335
    %v338 = vpack.c.bf16 %v336, %v336
    %v339 = vpack.c.bf16 %v337, %v337
    %v340 = vxor.u32 %v293, 2147516416
    %v341 = vxor.u32 %v295, 2147516416
    %v342 = vunpack.c.l.bf16 %v340
    %v343 = vunpack.c.l.bf16 %v341
    %v344 = vmul.f32 %v342, 1.442695
    %v345 = vpow.pop %v344
    %v346 = vmul.f32 %v343, 1.442695
    %v347 = vpow.pop %v346
    %v348 = vpack.c.bf16 %v345, %v345
    %v349 = vpack.c.bf16 %v347, %v347
    %v350 = vunpack.c.l.bf16 %v348
    %v351 = vunpack.c.l.bf16 %v349
    %v352 = vadd.f32 %v350, 1.0
    %v353 = vadd.f32 %v351, 1.0
    %v354 = vpack.c.bf16 %v352, %v352
    %v355 = vpack.c.bf16 %v353, %v353
    %v356 = vunpack.c.h.bf16 %v354
    %v357 = vunpack.c.l.bf16 %v354
    %v358 = vrcp.pop %v356
    %v359 = vmul.f32 %v312, %v358
    %v360 = vrcp.pop %v357
    %v361 = vmul.f32 %v313, %v360
    %v362 = vpack.c.bf16 %v359, %v361
    %v363 = vunpack.c.h.bf16 %v355
    %v364 = vunpack.c.l.bf16 %v355
    %v365 = vrcp.pop %v363
    %v366 = vmul.f32 %v312, %v365
    %v367 = vrcp.pop %v364
    %v368 = vmul.f32 %v313, %v367
    %v369 = vpack.c.bf16 %v366, %v368
    %v370 = vunpack.c.l.bf16 %v320
    %v371 = vunpack.c.l.bf16 %v327
    %v372 = vunpack.c.l.bf16 %v338
    %v373 = vunpack.c.l.bf16 %v339
    %v374 = vmul.f32 %v370, %v372
    %v375 = vmul.f32 %v371, %v373
    %v376 = vpack.c.bf16 %v374, %v374
    %v377 = vpack.c.bf16 %v375, %v375
    %v378 = vunpack.c.l.bf16 %v376
    %v379 = vunpack.c.l.bf16 %v377
    %v380 = vtanh.pop %v378
    %v381 = vtanh.pop %v379
    %v382 = vpack.c.bf16 %v380, %v380
    %v383 = vpack.c.bf16 %v381, %v381
    %v384 = vunpack.c.l.bf16 %v362
    %v385 = vunpack.c.l.bf16 %v369
    %v386 = vunpack.c.l.bf16 %v382
    %v387 = vunpack.c.l.bf16 %v383
    %v388 = vmul.f32 %v384, %v386
    %v389 = vmul.f32 %v385, %v387
    %v390 = vpack.c.bf16 %v389, %v388
    %v391 = vld [vmem:[#allocation4] sm:$0xff]
    %v392 = vld [vmem:[#allocation4 + $0x8] sm:$0xf]
    %v393 = vld [vmem:[#allocation4 + $0xc] sm:$0xff]
    %v394 = vld [vmem:[#allocation4 + $0x14] sm:$0xf]
    %v395 = vld [vmem:[#allocation4 + $0x18] sm:$0xff]
    %v396 = vld [vmem:[#allocation4 + $0x20] sm:$0xf]
    %v397 = vld [vmem:[#allocation4 + $0x24] sm:$0xff]
    %v398 = vld [vmem:[#allocation4 + $0x2c] sm:$0xf]
    %v399 = vld [vmem:[#allocation4 + $0x30] sm:$0xff]
    %v400 = vld [vmem:[#allocation4 + $0x38] sm:$0xf]
    %v401 = vld [vmem:[#allocation4 + $0x3c] sm:$0xff]
    %v402 = vld [vmem:[#allocation4 + $0x44] sm:$0xf]
    %v403 = vld [vmem:[#allocation4 + $0x48] sm:$0xff]
    %v404 = vld [vmem:[#allocation4 + $0x50] sm:$0xf]
    %v405 = vld [vmem:[#allocation4 + $0x54] sm:$0xff]
    %v406 = vld [vmem:[#allocation4 + $0x5c] sm:$0xf]
    %v407 = vld [vmem:[#allocation4 + $0x60] sm:$0xff]
    %v408 = vld [vmem:[#allocation4 + $0x68] sm:$0xf]
    %v409 = vld [vmem:[#allocation4 + $0x6c] sm:$0xff]
    %v410 = vld [vmem:[#allocation4 + $0x74] sm:$0xf]
    %v411 = vld [vmem:[#allocation4 + $0x78] sm:$0xff]
    %v412 = vld [vmem:[#allocation4 + $0x80] sm:$0xf]
    %v413 = vld [vmem:[#allocation4 + $0x84] sm:$0xff]
    %v414 = vld [vmem:[#allocation4 + $0x8c] sm:$0xf]
    %v415 = vld [vmem:[#allocation4 + $0x90] sm:$0xff]
    %v416 = vld [vmem:[#allocation4 + $0x98] sm:$0xf]
    %v417 = vld [vmem:[#allocation4 + $0x9c] sm:$0xff]
    %v418 = vld [vmem:[#allocation4 + $0xa4] sm:$0xf]
    %v419 = vld [vmem:[#allocation4 + $0xa8] sm:$0xff]
    %v420 = vld [vmem:[#allocation4 + $0xb0] sm:$0xf]
    %v421 = vld [vmem:[#allocation4 + $0xb4] sm:$0xff]
    %v422 = vld [vmem:[#allocation4 + $0xbc] sm:$0xf]
    %v423 = vld [vmem:[%s4] sm:$0x7]
    %v425 = vperm.slane %v423, 0
    %v426 = vperm.slane %v423, 1
    %v427 = vperm.slane %v423, 2
    %v463 = vunpack.c.l.b16 %v391
    %v464 = vunpack.c.h.b16 %v391
    %v465 = vunpack.c.l.b16 %v392
    %v466 = vunpack.c.l.b16 %v393
    %v467 = vunpack.c.h.b16 %v393
    %v468 = vunpack.c.l.b16 %v394
    %v469 = vunpack.c.l.b16 %v395
    %v470 = vunpack.c.h.b16 %v395
    %v471 = vunpack.c.l.b16 %v396
    %v472 = vunpack.c.l.b16 %v397
    %v473 = vunpack.c.h.b16 %v397
    %v474 = vunpack.c.l.b16 %v398
    %v475 = vunpack.c.l.b16 %v399
    %v476 = vunpack.c.h.b16 %v399
    %v477 = vunpack.c.l.b16 %v400
    %v478 = vunpack.c.l.b16 %v401
    %v479 = vunpack.c.h.b16 %v401
    %v480 = vunpack.c.l.b16 %v402
    %v481 = vunpack.c.l.b16 %v403
    %v482 = vunpack.c.h.b16 %v403
    %v483 = vunpack.c.l.b16 %v404
    %v484 = vunpack.c.l.b16 %v405
    %v485 = vunpack.c.h.b16 %v405
    %v486 = vunpack.c.l.b16 %v406
    %v487 = vunpack.c.l.b16 %v407
    %v488 = vunpack.c.h.b16 %v407
    %v489 = vunpack.c.l.b16 %v408
    %v490 = vunpack.c.l.b16 %v409
    %v491 = vunpack.c.h.b16 %v409
    %v492 = vunpack.c.l.b16 %v410
    %v493 = vunpack.c.l.b16 %v411
    %v494 = vunpack.c.h.b16 %v411
    %v495 = vunpack.c.l.b16 %v412
    %v496 = vunpack.c.l.b16 %v413
    %v497 = vunpack.c.h.b16 %v413
    %v498 = vunpack.c.l.b16 %v414
    %v499 = vunpack.c.l.b16 %v415
    %v500 = vunpack.c.h.b16 %v415
    %v501 = vunpack.c.l.b16 %v416
    %v502 = vunpack.c.l.b16 %v417
    %v503 = vunpack.c.h.b16 %v417
    %v504 = vunpack.c.l.b16 %v418
    %v505 = vunpack.c.l.b16 %v419
    %v506 = vunpack.c.h.b16 %v419
    %v507 = vunpack.c.l.b16 %v420
    %v508 = vunpack.c.l.b16 %v421
    %v509 = vunpack.c.h.b16 %v421
    %v510 = vunpack.c.l.b16 %v422
    %v511 = vpack.c.b16 %v466, %v463
    %v512 = vpack.c.b16 %v467, %v464
    %v513 = vpack.c.b16 %v468, %v465
    %v514 = vpack.c.b16 %v472, %v469
    %v515 = vpack.c.b16 %v473, %v470
    %v516 = vpack.c.b16 %v474, %v471
    %v517 = vpack.c.b16 %v478, %v475
    %v518 = vpack.c.b16 %v479, %v476
    %v519 = vpack.c.b16 %v480, %v477
    %v520 = vpack.c.b16 %v484, %v481
    %v521 = vpack.c.b16 %v485, %v482
    %v522 = vpack.c.b16 %v486, %v483
    %v523 = vpack.c.b16 %v490, %v487
    %v524 = vpack.c.b16 %v491, %v488
    %v525 = vpack.c.b16 %v492, %v489
    %v526 = vpack.c.b16 %v496, %v493
    %v527 = vpack.c.b16 %v497, %v494
    %v528 = vpack.c.b16 %v498, %v495
    %v529 = vpack.c.b16 %v502, %v499
    %v530 = vpack.c.b16 %v503, %v500
    %v531 = vpack.c.b16 %v504, %v501
    %v532 = vpack.c.b16 %v508, %v505
    %v533 = vpack.c.b16 %v509, %v506
    %v534 = vpack.c.b16 %v510, %v507
    %559 = vmatpush.bf16.msra.mxu0 %v532
    %560 = vmatpush.bf16.msra.mxu0 %v529
    %561 = vmatpush.bf16.msra.mxu0 %v526
    %562 = vmatpush.bf16.msra.mxu0 %v523
    %563 = vmatpush.bf16.msra.mxu0 %v520
    %564 = vmatpush.bf16.msra.mxu0 %v517
    %565 = vmatpush.bf16.msra.mxu0 %v514
    %566 = vmatpush.bf16.msra.mxu0 %v511
    %567 = vmatmul.bf16.gmra.mxu0 %v390
    %v568 = vpop.f32.mrf.mxu0
    %v569 = vadd.f32 %v425, %v568
    %v570 = vpop.f32.mrf.mxu0
    %v571 = vadd.f32 %v425, %v570
    %572 = vdwg.mxu0
    %573 = vmatpush.bf16.msra.mxu0 %v533
    %574 = vmatpush.bf16.msra.mxu0 %v530
    %575 = vmatpush.bf16.msra.mxu0 %v527
    %576 = vmatpush.bf16.msra.mxu0 %v524
    %577 = vmatpush.bf16.msra.mxu0 %v521
    %578 = vmatpush.bf16.msra.mxu0 %v518
    %579 = vmatpush.bf16.msra.mxu0 %v515
    %580 = vmatpush.bf16.msra.mxu0 %v512
    %581 = vmatmul.bf16.gmra.mxu0 %v390
    %v582 = vpop.f32.mrf.mxu0
    %v583 = vadd.f32 %v426, %v582
    %v584 = vpop.f32.mrf.mxu0
    %v585 = vadd.f32 %v426, %v584
    %586 = vdwg.mxu0
    %587 = vmatpush.bf16.msra.mxu0 %v534
    %588 = vmatpush.bf16.msra.mxu0 %v531
    %589 = vmatpush.bf16.msra.mxu0 %v528
    %590 = vmatpush.bf16.msra.mxu0 %v525
    %591 = vmatpush.bf16.msra.mxu0 %v522
    %592 = vmatpush.bf16.msra.mxu0 %v519
    %593 = vmatpush.bf16.msra.mxu0 %v516
    %594 = vmatpush.bf16.msra.mxu0 %v513
    %595 = vmatmul.bf16.gmra.mxu0 %v390
    %v596 = vpop.f32.mrf.mxu0
    %v597 = vadd.f32 %v427, %v596
    %v598 = vpop.f32.mrf.mxu0
    %v599 = vadd.f32 %v427, %v598
    %600 = vdwg.mxu0
    %v601 = vpack.c.bf16 %v583, %v569
    %v602 = vpack.c.bf16 %v597, %v597
    %v603 = vpack.c.bf16 %v585, %v571
    %v604 = vpack.c.bf16 %v599, %v599
    %v605 = vxor.u32 %v601, 2147516416
    %v606 = vxor.u32 %v603, 2147516416
    %v607 = vunpack.c.l.bf16 %v605
    %v608 = vunpack.c.l.bf16 %v606
    %v609 = vmul.f32 %v607, 1.442695
    %v610 = vpow.pop %v609
    %v611 = vmul.f32 %v608, 1.442695
    %v612 = vpow.pop %v611
    %v613 = vpack.c.bf16 %v610, %v610
    %v614 = vpack.c.bf16 %v612, %v612
    %v615 = vunpack.c.l.bf16 %v613
    %v616 = vunpack.c.l.bf16 %v614
    %v617 = vadd.f32 %v615, 1.0
    %v618 = vadd.f32 %v616, 1.0
    %v619 = vpack.c.bf16 %v617, %v617
    %v620 = vpack.c.bf16 %v618, %v618
    %v621 = vunpack.c.h.bf16 %v619
    %v622 = vunpack.c.l.bf16 %v619
    %v623 = vrcp.pop %v621
    %v624 = vmul.f32 %v312, %v623
    %v625 = vrcp.pop %v622
    %v626 = vmul.f32 %v313, %v625
    %v627 = vpack.c.bf16 %v624, %v626
    %v628 = vunpack.c.h.bf16 %v620
    %v629 = vunpack.c.l.bf16 %v620
    %v630 = vrcp.pop %v628
    %v631 = vmul.f32 %v312, %v630
    %v632 = vrcp.pop %v629
    %v633 = vmul.f32 %v313, %v632
    %v634 = vpack.c.bf16 %v631, %v633
    %v637 = vrot.slane %v601, 4
    %v638 = vrot.slane %v603, 4
    %v641 = vunpack.c.l.bf16 %v637
    %v642 = vunpack.c.l.bf16 %v638
    %v643 = vtanh.pop %v641
    %v644 = vtanh.pop %v642
    %v645 = vpack.c.bf16 %v643, %v643
    %v646 = vpack.c.bf16 %v644, %v644
    %v647 = vxor.u32 %v602, 2147516416
    %v648 = vxor.u32 %v604, 2147516416
    %v649 = vunpack.c.l.bf16 %v647
    %v650 = vunpack.c.l.bf16 %v648
    %v651 = vmul.f32 %v649, 1.442695
    %v652 = vpow.pop %v651
    %v653 = vmul.f32 %v650, 1.442695
    %v654 = vpow.pop %v653
    %v655 = vpack.c.bf16 %v652, %v652
    %v656 = vpack.c.bf16 %v654, %v654
    %v657 = vunpack.c.l.bf16 %v655
    %v658 = vunpack.c.l.bf16 %v656
    %v659 = vadd.f32 %v657, 1.0
    %v660 = vadd.f32 %v658, 1.0
    %v661 = vpack.c.bf16 %v659, %v659
    %v662 = vpack.c.bf16 %v660, %v660
    %v663 = vunpack.c.h.bf16 %v661
    %v664 = vunpack.c.l.bf16 %v661
    %v665 = vrcp.pop %v663
    %v666 = vmul.f32 %v312, %v665
    %v667 = vrcp.pop %v664
    %v668 = vmul.f32 %v313, %v667
    %v669 = vpack.c.bf16 %v666, %v668
    %v670 = vunpack.c.h.bf16 %v662
    %v671 = vunpack.c.l.bf16 %v662
    %v672 = vrcp.pop %v670
    %v673 = vmul.f32 %v312, %v672
    %v674 = vrcp.pop %v671
    %v675 = vmul.f32 %v313, %v674
    %v676 = vpack.c.bf16 %v673, %v675
    %v677 = vunpack.c.l.bf16 %v627
    %v678 = vunpack.c.l.bf16 %v634
    %v679 = vunpack.c.l.bf16 %v645
    %v680 = vunpack.c.l.bf16 %v646
    %v681 = vmul.f32 %v677, %v679
    %v682 = vmul.f32 %v678, %v680
    %v683 = vpack.c.bf16 %v681, %v681
    %v684 = vpack.c.bf16 %v682, %v682
    %v685 = vunpack.c.l.bf16 %v683
    %v686 = vunpack.c.l.bf16 %v684
    %v687 = vtanh.pop %v685
    %v688 = vtanh.pop %v686
    %v689 = vpack.c.bf16 %v687, %v687
    %v690 = vpack.c.bf16 %v688, %v688
    %v691 = vunpack.c.l.bf16 %v669
    %v692 = vunpack.c.l.bf16 %v676
    %v693 = vunpack.c.l.bf16 %v689
    %v694 = vunpack.c.l.bf16 %v690
    %v695 = vmul.f32 %v691, %v693
    %v696 = vmul.f32 %v692, %v694
    %v697 = vpack.c.bf16 %v696, %v695
    %v698 = vld [vmem:[#allocation6] sm:$0xf]
    %v699 = vld [vmem:[#allocation6 + $0x4] sm:$0xf]
    %v700 = vld [vmem:[#allocation6 + $0x8] sm:$0xf]
    %v701 = vld [vmem:[#allocation6 + $0xc] sm:$0xf]
    %v702 = vld [vmem:[#allocation6 + $0x10] sm:$0xf]
    %v703 = vld [vmem:[#allocation6 + $0x14] sm:$0xf]
    %v704 = vld [vmem:[#allocation6 + $0x18] sm:$0xf]
    %v705 = vld [vmem:[#allocation6 + $0x1c] sm:$0xf]
    %v706 = vld [vmem:[#allocation6 + $0x20] sm:$0xf]
    %v707 = vld [vmem:[#allocation6 + $0x24] sm:$0xf]
    %v708 = vld [vmem:[#allocation6 + $0x28] sm:$0xf]
    %v709 = vld [vmem:[#allocation6 + $0x2c] sm:$0xf]
    %v710 = vld [vmem:[#allocation6 + $0x30] sm:$0xf]
    %v711 = vld [vmem:[#allocation6 + $0x34] sm:$0xf]
    %v712 = vld [vmem:[#allocation6 + $0x38] sm:$0xf]
    %v713 = vld [vmem:[#allocation6 + $0x3c] sm:$0xf]
    %v714 = vld [vmem:[%s6] sm:$0x1]
    %v716 = vperm.slane %v714, 0
    %v734 = vunpack.c.l.b16 %v698
    %v735 = vunpack.c.l.b16 %v699
    %v736 = vunpack.c.l.b16 %v700
    %v737 = vunpack.c.l.b16 %v701
    %v738 = vunpack.c.l.b16 %v702
    %v739 = vunpack.c.l.b16 %v703
    %v740 = vunpack.c.l.b16 %v704
    %v741 = vunpack.c.l.b16 %v705
    %v742 = vunpack.c.l.b16 %v706
    %v743 = vunpack.c.l.b16 %v707
    %v744 = vunpack.c.l.b16 %v708
    %v745 = vunpack.c.l.b16 %v709
    %v746 = vunpack.c.l.b16 %v710
    %v747 = vunpack.c.l.b16 %v711
    %v748 = vunpack.c.l.b16 %v712
    %v749 = vunpack.c.l.b16 %v713
    %v750 = vpack.c.b16 %v735, %v734
    %v751 = vpack.c.b16 %v737, %v736
    %v752 = vpack.c.b16 %v739, %v738
    %v753 = vpack.c.b16 %v741, %v740
    %v754 = vpack.c.b16 %v743, %v742
    %v755 = vpack.c.b16 %v745, %v744
    %v756 = vpack.c.b16 %v747, %v746
    %v757 = vpack.c.b16 %v749, %v748
    %766 = vmatpush.bf16.msra.mxu0 %v757
    %767 = vmatpush.bf16.msra.mxu0 %v756
    %768 = vmatpush.bf16.msra.mxu0 %v755
    %769 = vmatpush.bf16.msra.mxu0 %v754
    %770 = vmatpush.bf16.msra.mxu0 %v753
    %771 = vmatpush.bf16.msra.mxu0 %v752
    %772 = vmatpush.bf16.msra.mxu0 %v751
    %773 = vmatpush.bf16.msra.mxu0 %v750
    %774 = vmatmul.bf16.gmra.mxu0 %v697
    %v775 = vpop.f32.mrf.mxu0
    %v776 = vadd.f32 %v716, %v775
    %v777 = vpop.f32.mrf.mxu0
    %v778 = vadd.f32 %v716, %v777
    %779 = vdwg.mxu0
    %v780 = vpack.c.bf16 %v776, %v776
    %v781 = vpack.c.bf16 %v778, %v778
    %782 = vst [vmem:[%s7] sm:$0xf] %v780
    %783 = vst [vmem:[%s7 + $0x4] sm:$0xf] %v781
    // Predicated region
    $region42: #{generator_forward.1} parent=1 // pred_check
      _
    $region43: #{generator_forward.1} parent=1 // pred_check_branch
      %785 = sbr.rel (0) target = $region45
    $region44: #{generator_forward.1} parent=1 // pred_region
      _
    $region45: #{generator_forward.1} parent=1 // pred_fallthru
      _
    // Predicated region
    $region46: #{generator_forward.1} parent=1 // pred_check
      _
    $region47: #{generator_forward.1} parent=1 // pred_check_branch
      %787 = sbr.rel (0) target = $region49
    $region48: #{generator_forward.1} parent=1 // pred_region
      _
    $region49: #{generator_forward.1} parent=1 // pred_fallthru
      _
    %788 = vsyncpa [#allocation3], 1
    %789 = vsyncpa [#allocation5], 1

</llo_original>
